<compile_context>
chip_gen: v5e
topology: v5e:2x2
jax: 0.10.0
libtpu: 0.0.40
codegen_flags: <defaults>
</compile_context>

<pallas_src>
import jax
import jax.numpy as jnp
from jax.experimental import pallas as pl
from jax.experimental.pallas import tpu as pltpu


_MIN_PALLAS_ELEMS = 32768                 # below this, plain XLA is faster
_MAX_COLS = 4096                          # widest lane-dense slab we consider
_FALLBACK_COLS = 512                      # prefix width for irregular totals
_TARGET_BLOCK_BYTES = 2 * 1024 * 1024     # ~2 MiB input/block ≈ 85% roofline


def _sigmoid_kernel(x_ref, o_ref):
    x = x_ref[...].astype(jnp.float32)
    o_ref[...] = (1.0 / (1.0 + jnp.exp(-x))).astype(o_ref.dtype)


def _xla_sigmoid(x):
    return (1.0 / (1.0 + jnp.exp(-x.astype(jnp.float32)))).astype(x.dtype)


def _cdiv(a, b):
    return -(-a // b)


def _round_up(a, b):
    return _cdiv(a, b) * b


def _sublane_multiple(dtype) -> int:
    # Packed sublane tile: f32/i32 -> 8, bf16/f16 -> 16, int8/fp8 -> 32.
    return {4: 8, 2: 16, 1: 32}.get(jnp.dtype(dtype).itemsize, 8)


def _vmem_capacity_bytes() -> int:
    try:
        return int(pltpu.get_tpu_info().vmem_capacity_bytes)
    except Exception:
        return 64 * 1024 * 1024            # conservative (v7x physical VMEM)


def _pick_cols(total: int, sub: int):
    """Largest multiple-of-128 divisor of `total` (<= _MAX_COLS), preferring
    widths that leave enough rows for a >= 4-step pipeline."""
    for min_rows in (4 * sub, sub, 1):
        for c in range(_MAX_COLS, 0, -128):
            if total % c == 0 and total // c >= min_rows:
                return c
    return None


def _run_pallas_2d(x2, tile_r, cols, grid_r, out_dtype, vmem_limit):
    rows = x2.shape[0]
    itemsize = jnp.dtype(out_dtype).itemsize
    n = rows * cols
    return pl.pallas_call(
        _sigmoid_kernel,
        out_shape=jax.ShapeDtypeStruct((rows, cols), out_dtype),
        grid=(grid_r,),
        in_specs=[pl.BlockSpec((tile_r, cols), lambda i: (i, 0))],
        out_specs=pl.BlockSpec((tile_r, cols), lambda i: (i, 0)),
        compiler_params=pltpu.CompilerParams(
            dimension_semantics=("parallel",),       # shards across v7x's 2 TCs
            vmem_limit_bytes=vmem_limit,
        ),
        cost_estimate=pl.CostEstimate(
            flops=4 * n,
            transcendentals=n,
            bytes_accessed=2 * n * itemsize,         # memory-bound hint for XLA
        ),
    )(x2)


def sigmoid_pallas(x: jax.Array, *, min_pallas_elems: int = _MIN_PALLAS_ELEMS) -> jax.Array:
    orig_shape = x.shape
    dtype = x.dtype
    total = x.size

    # Small-input fast path: pallas_call launch + plumbing dwarfs the work.
    if total == 0 or total < min_pallas_elems:
        return _xla_sigmoid(x)

    sub = _sublane_multiple(dtype)
    itemsize = jnp.dtype(dtype).itemsize

    flat = x.reshape(-1)                           # contiguous reshape: free
    cols = _pick_cols(total, sub)

    if cols is not None:
        rows = total // cols
        rem = 0
        x2 = flat.reshape(rows, cols)              # free (divides exactly)
    else:
        # Irregular element count: Pallas on the largest multiple-of-cols
        # prefix, plain XLA on the (< cols) tail — no full-array pad/slice.
        cols = _FALLBACK_COLS
        rows = total // cols
        rem = total - rows * cols
        if rows == 0:
            return _xla_sigmoid(x)
        x2 = jax.lax.slice(flat, (0,), (rows * cols,)).reshape(rows, cols)

    # ---- tile sizing -------------------------------------------------------
    vmem_cap = _vmem_capacity_bytes()
    vmem_limit = min(vmem_cap // 2, 64 * 1024 * 1024)

    # f32-aware live bytes per element per block row: double-buffered input +
    # output blocks (4 * itemsize) plus ~two f32 temporaries from the
    # in-kernel upcast (8 bytes).
    live_bytes_per_elem = 4 * itemsize + 8
    budget_rows = max(sub, (vmem_limit * 3 // 4) // (cols * live_bytes_per_elem))
    target_rows = max(sub, _TARGET_BLOCK_BYTES // (cols * itemsize))

    # Pipeline-friendliness: aim for >= 4 grid steps (DMA/compute overlap and
    # work for both v7x TensorCores); never silently collapse to 1 step.
    if rows >= 4 * sub:
        min_grid = 4
    elif rows >= 2 * sub:
        min_grid = 2
    else:
        min_grid = 1
    grid_cap_rows = _round_up(_cdiv(rows, min_grid), sub)

    tile_r = min(budget_rows, target_rows, grid_cap_rows)
    tile_r = max(sub, (tile_r // sub) * sub)
    tile_r = min(tile_r, rows)                     # rows < sub => full-extent block
    grid_r = _cdiv(rows, tile_r)                   # partial last block is OK

    out2 = _run_pallas_2d(x2, tile_r, cols, grid_r, dtype, vmem_limit)

    out_flat = out2.reshape(-1)
    if rem:
        tail = _xla_sigmoid(jax.lax.slice(flat, (rows * cols,), (total,)))
        out_flat = jnp.concatenate([out_flat, tail])
    return out_flat.reshape(orig_shape)


if __name__ == "__main__":
    key = jax.random.PRNGKey(0)
    k1, k2, k3, k4 = jax.random.split(key, 4)

    def ref_sigmoid(v):
        return (1.0 / (1.0 + jnp.exp(-v.astype(jnp.float32)))).astype(v.dtype)

    # 1) Canonical module-sized input; force the Pallas path so the kernel is
    #    exercised at the spec shape (2, 4, 16, 16).
    x = jax.random.normal(k1, (2, 4, 16, 16), dtype=jnp.float32)
    y = jax.block_until_ready(sigmoid_pallas(x, min_pallas_elems=0))
    assert y.shape == x.shape and y.dtype == x.dtype
    assert jnp.allclose(y, ref_sigmoid(x), atol=1e-5, rtol=1e-5)

    # 2) Same input via the default (small-input) fast path.
    y_fast = jax.block_until_ready(sigmoid_pallas(x))
    assert jnp.allclose(y_fast, ref_sigmoid(x), atol=1e-5, rtol=1e-5)

    # 3) Larger f32 input taking the Pallas path (lane-dense fold, >=4 steps).
    x_f32 = jax.random.normal(k2, (8, 4, 64, 64), dtype=jnp.float32) * 4.0
    y_f32 = jax.block_until_ready(sigmoid_pallas(x_f32))
    assert jnp.allclose(y_f32, ref_sigmoid(x_f32), atol=1e-5, rtol=1e-5)

    # 4) bf16 input (kernel upcasts to f32 internally, casts back on store).
    x_bf16 = (jax.random.normal(k3, (4, 8, 64, 64)) * 3.0).astype(jnp.bfloat16)
    y_bf16 = jax.block_until_ready(sigmoid_pallas(x_bf16))
    assert y_bf16.dtype == jnp.bfloat16
    assert jnp.allclose(y_bf16.astype(jnp.float32),
                        ref_sigmoid(x_bf16).astype(jnp.float32),
                        atol=1e-2, rtol=1e-2)

    # 5) Irregular element count (exercises the prefix + XLA-tail path).
    x_odd = jax.random.normal(k4, (6, 7, 55, 33), dtype=jnp.float32)
    y_odd = jax.block_until_ready(sigmoid_pallas(x_odd))
    assert jnp.allclose(y_odd, ref_sigmoid(x_odd), atol=1e-5, rtol=1e-5)

    print("KERNEL_OK")
</pallas_src>

<mosaic_0001>
module attributes {stable_mosaic.version = 11 : i64} {
  func.func @_sigmoid_kernel(%arg0: i32, %arg1: memref<8x256xf32, #tpu.memory_space<vmem>>, %arg2: memref<8x256xf32, #tpu.memory_space<vmem>>) attributes {dimension_semantics = [#tpu.dimension_semantics<parallel>], iteration_bounds = array<i64: 1>, scalar_prefetch = 0 : i64, scratch_operands = 0 : i64, tpu.core_type = #tpu.core_type<tc>, window_params = [{transform_indices = @transform_0, window_bounds = array<i64: 8, 256>}, {transform_indices = @transform_1, window_bounds = array<i64: 8, 256>}]} {
    %c0 = arith.constant 0 : index
    %c0_0 = arith.constant 0 : index
    %0 = vector.load %arg1[%c0, %c0_0] : memref<8x256xf32, #tpu.memory_space<vmem>>, vector<8x256xf32>
    %cst = arith.constant 0.000000e+00 : f32
    %1 = vector.broadcast %cst : f32 to vector<8x256xf32>
    %2 = arith.subf %1, %0 : vector<8x256xf32>
    %3 = math.exp %2 : vector<8x256xf32>
    %cst_1 = arith.constant 1.000000e+00 : f32
    %4 = vector.broadcast %cst_1 : f32 to vector<8x256xf32>
    %5 = arith.addf %4, %3 : vector<8x256xf32>
    %cst_2 = arith.constant 1.000000e+00 : f32
    %6 = vector.broadcast %cst_2 : f32 to vector<8x256xf32>
    %7 = arith.divf %6, %5 : vector<8x256xf32>
    %c0_3 = arith.constant 0 : index
    %c0_4 = arith.constant 0 : index
    %8 = vector.load %arg2[%c0_3, %c0_4] : memref<8x256xf32, #tpu.memory_space<vmem>>, vector<8x256xf32>
    tpu.vector_store %arg2[%c0_3, %c0_4], %7 {strides = array<i32>} : memref<8x256xf32, #tpu.memory_space<vmem>>, vector<8x256xf32>,
    return
  }
  func.func @transform_0(%arg0: i32) -> (i32, i32) {
    %c0_i32 = arith.constant 0 : i32
    %c0_i32_0 = arith.constant 0 : i32
    return %arg0, %c0_i32 : i32, i32
  }
  func.func @transform_1(%arg0: i32) -> (i32, i32) {
    %c0_i32 = arith.constant 0 : i32
    %c0_i32_0 = arith.constant 0 : i32
    return %arg0, %c0_i32 : i32, i32
  }
}

</mosaic_0001>

<llo_original>
// kernel: tpu_custom_call.1
$region0: #{tpu_custom_call.1}
  #allocation0 [shape = 'u32[]', space=smem, size = 0x4, offset = 0x4, fixed_abs, tag = 'smem constant byte address 0x4 - core index']
  #allocation1 [shape = 'u32[72,128]{1,0:T(1,128)}', space=vmem, size = 0x9000, scoped, tag = 'internal scratch']
  %s0 = inlined_call_operand.hbm [shape: f32[8,256], index: 0, kind: input, shape index: {}]
  %s1 = inlined_call_operand.hbm [shape: f32[8,256], index: 1, kind: output, shape index: {}]
  %s2 = sld [smem:[#allocation0]]
  $region18: #{tpu_custom_call.1} parent=0
    _
  %s4 = ssub.s32 1, %s2
  %s5 = scalar_select 0, %s4, %s2
  $region1: #{tpu_custom_call.1} parent=0
    #allocation2 [shape = 'u8[8192]{0}', space=vmem, size = 0x2000, scoped, tag = 'input window, operand 0, single buffered']
    #allocation3 [shape = 's32[1]{0}', space=sflag, size = 0x4, scoped, tag = 'scoped memory for tpu_custom_call.1']
    #allocation4 [shape = 's32[1]{0}', space=sflag, size = 0x4, scoped, tag = 'scoped memory for tpu_custom_call.1']
    #allocation5 [shape = 'u8[8192]{0}', space=vmem, size = 0x2000, scoped, tag = 'output window, operand 0, single buffered']
    %6 = vsyncpa [#allocation3], 0
    %7 = vsyncpa [#allocation4], 0
    // Predicated region
    $region2: #{tpu_custom_call.1} parent=1 // pred_check
      _
    $region3: #{tpu_custom_call.1} parent=1 // pred_check_branch
      %9 = sbr.rel (0) target = $region5
    $region4: #{tpu_custom_call.1} parent=1 // pred_region
      %11 = vsyncadd [#allocation3], 0
      %s13 = sshll.u32 %s0, 4
      %s14 = int_to_ptr.hbm [resolvable:$true] %s13
      %s15 = sshll.u32 [#allocation2], 4
      %s16 = int_to_ptr.vmem [resolvable:$true] %s15
      %18 = dma.hbm_to_vmem [thread:$0]  %s14, 256, %s16, [#allocation3]
    $region5: #{tpu_custom_call.1} parent=1 // pred_fallthru
      _
    // Predicated region
    $region6: #{tpu_custom_call.1} parent=1 // pred_check
      _
    $region7: #{tpu_custom_call.1} parent=1 // pred_check_branch
      %20 = sbr.rel (0) target = $region9
    $region8: #{tpu_custom_call.1} parent=1 // pred_region
      %22 = dma.done [#allocation3], 256
    $region9: #{tpu_custom_call.1} parent=1 // pred_fallthru
      _
    %v23 = vld [vmem:[#allocation2] sm:$0xff]
    %v24 = vld [vmem:[#allocation2 + $0x8] sm:$0xff]
    %v25 = vsub.f32 0.0, %v23
    %v26 = vsub.f32 0.0, %v24
    %v27 = vmul.f32 %v25, 1.442695
    %v28 = vpow.pop %v27
    %v29 = vmul.f32 %v26, 1.442695
    %v30 = vpow.pop %v29
    %v31 = vadd.f32 %v28, 1.0
    %v32 = vadd.f32 %v30, 1.0
    %v33 = vrcp.pop %v31
    %v34 = vmul.f32 %v31, %v33
    %v35 = vsub.f32 1.0, %v34
    %v36 = vmul.f32 %v33, %v35
    %v37 = vadd.f32 %v33, %v36
    %vm38 = vweird.f32 %v31
    %vm39 = vweird.f32 %v33
    %vm40 = vmor %vm38, %vm39
    %v41 = vsel %vm40, %v33, %v37
    %v42 = vand.u32 2147483647, %v31
    %vm43 = vcmp.eq.f32.partialorder %v42, 8.507059e+37
    %v44 = vand.u32 %v31, 2147483648
    %v45 = vor.u32 1.1754944e-38, %v44
    %v46 = vsel %vm43, %v45, %v41
    %v47 = vmul.f32 1.0, %v46
    %v48 = vrcp.pop %v32
    %v49 = vmul.f32 %v32, %v48
    %v50 = vsub.f32 1.0, %v49
    %v51 = vmul.f32 %v48, %v50
    %v52 = vadd.f32 %v48, %v51
    %vm53 = vweird.f32 %v32
    %vm54 = vweird.f32 %v48
    %vm55 = vmor %vm53, %vm54
    %v56 = vsel %vm55, %v48, %v52
    %v57 = vand.u32 2147483647, %v32
    %vm58 = vcmp.eq.f32.partialorder %v57, 8.507059e+37
    %v59 = vand.u32 %v32, 2147483648
    %v60 = vor.u32 1.1754944e-38, %v59
    %v61 = vsel %vm58, %v60, %v56
    %v62 = vmul.f32 1.0, %v61
    %63 = vst [vmem:[#allocation5] sm:$0xff] %v47
    %64 = vst [vmem:[#allocation5 + $0x8] sm:$0xff] %v62
    // Predicated region
    $region10: #{tpu_custom_call.1} parent=1 // pred_check
      _
    $region11: #{tpu_custom_call.1} parent=1 // pred_check_branch
      %66 = sbr.rel (0) target = $region13
    $region12: #{tpu_custom_call.1} parent=1 // pred_region
      %68 = vsyncadd [#allocation4], 0
      %s70 = sshll.u32 [#allocation5], 4
      %s71 = int_to_ptr.vmem [resolvable:$true] %s70
      %s72 = sshll.u32 %s1, 4
      %s73 = int_to_ptr.hbm [resolvable:$true] %s72
      %75 = dma.vmem_to_hbm [thread:$0]  %s71, 256, %s73, [#allocation4]
    $region13: #{tpu_custom_call.1} parent=1 // pred_fallthru
      _
    // Predicated region
    $region14: #{tpu_custom_call.1} parent=1 // pred_check
      _
    $region15: #{tpu_custom_call.1} parent=1 // pred_check_branch
      %77 = sbr.rel (0) target = $region17
    $region16: #{tpu_custom_call.1} parent=1 // pred_region
      %79 = dma.done [#allocation4], 256
    $region17: #{tpu_custom_call.1} parent=1 // pred_fallthru
      _
    %80 = vsyncpa [#allocation3], 1
    %81 = vsyncpa [#allocation4], 1

</llo_original>
